<compile_context>
chip_gen: v6e
topology: v6e:2x2x1
jax: 0.10.0
libtpu: 0.0.40
codegen_flags: <defaults>
</compile_context>

<pallas_src>
import jax
import jax.numpy as jnp
from jax.experimental import pallas as pl
from jax.experimental.pallas import tpu as pltpu


def _round_up(n, m):
    return ((n + m - 1) // m) * m


def wde_rnn_decoder_kernel(x_ref, w1_ref, b1_ref, w2_ref, b2_ref,
                           w3_ref, b3_ref, o_ref):
    # Layer 1: Linear(hidden*2 -> hidden_padded) + tanh  (f32 accumulate, f32 tanh)
    h1 = jnp.tanh(
        jnp.dot(x_ref[...], w1_ref[...], preferred_element_type=jnp.float32)
        + b1_ref[...])
    # Layer 2: Linear(hidden_padded -> 128) + tanh (context_dim == hidden)
    h2 = jnp.tanh(
        jnp.dot(h1.astype(w2_ref.dtype), w2_ref[...],
                preferred_element_type=jnp.float32)
        + b2_ref[...])
    # Layer 3: Linear(128 -> output_padded) + tanh
    h3 = jnp.tanh(
        jnp.dot(h2.astype(w3_ref.dtype), w3_ref[...],
                preferred_element_type=jnp.float32)
        + b3_ref[...])
    o_ref[...] = h3.astype(o_ref.dtype)


def wde_rnn_decoder(x, params, *, out_dim=None, batch_tile=None,
                    mm_dtype=jnp.float32):
    """x: (B, 2*hidden) float32. params: lane-padded, transposed weights/biases.

    mm_dtype: dtype of the MXU operands (f32 or bf16); accumulation, bias-add
    and tanh are always f32.
    """
    w1 = params["w1"].astype(mm_dtype)
    w2 = params["w2"].astype(mm_dtype)
    w3 = params["w3"].astype(mm_dtype)
    b1, b2, b3 = params["b1"], params["b2"], params["b3"]   # stay f32
    x = x.astype(mm_dtype)

    B, in_dim = x.shape
    out_p = w3.shape[1]                       # lane-padded output width
    if out_dim is None:
        out_dim = out_p

    # Tile sizing: whole batch in one step if small, else 512-row tiles.
    # Multiple of 16 covers both f32 (8, .) and bf16 (16, .) sublane tiling.
    if batch_tile is None:
        batch_tile = min(B, 512)
    batch_tile = max(16, _round_up(batch_tile, 16))
    Bp = _round_up(B, batch_tile)
    if Bp != B:
        x = jnp.pad(x, ((0, Bp - B), (0, 0)))

    grid = (Bp // batch_tile,)

    def resident(arr):
        # Whole (small) parameter tile resident every grid step. NOTE:
        # block_shape == full array shape, so the constant (0, 0) *block*
        # index is always valid; if the block shape ever shrinks, the index
        # map must change too.
        return pl.BlockSpec(arr.shape, lambda i: (0, 0))

    # Advisory cost estimate for XLA's scheduler.
    flops = 2 * Bp * (in_dim * w1.shape[1]
                      + w1.shape[1] * w2.shape[1]
                      + w2.shape[1] * out_p)
    transcendentals = Bp * (w1.shape[1] + w2.shape[1] + out_p)
    bytes_accessed = int(
        x.size * x.dtype.itemsize
        + sum(a.size * a.dtype.itemsize for a in (w1, b1, w2, b2, w3, b3))
        + Bp * out_p * 4)

    out = pl.pallas_call(
        wde_rnn_decoder_kernel,
        out_shape=jax.ShapeDtypeStruct((Bp, out_p), jnp.float32),
        grid_spec=pltpu.PrefetchScalarGridSpec(
            num_scalar_prefetch=0,
            grid=grid,
            in_specs=[
                pl.BlockSpec((batch_tile, in_dim), lambda i: (i, 0)),
                resident(w1), resident(b1),
                resident(w2), resident(b2),
                resident(w3), resident(b3),
            ],
            out_specs=pl.BlockSpec((batch_tile, out_p), lambda i: (i, 0)),
        ),
        compiler_params=pltpu.CompilerParams(
            dimension_semantics=("parallel",)),
        cost_estimate=pl.CostEstimate(flops=flops,
                                      transcendentals=transcendentals,
                                      bytes_accessed=bytes_accessed),
    )(x, w1, b1, w2, b2, w3, b3)

    return out[:B, :out_dim]


def init_params(key, hidden_size, output_size, context_dim, lane=128):
    """nn.Linear-style init (uniform +/- 1/sqrt(fan_in)), declared shapes,
    then transposed and zero-padded to 128-lane feature widths."""
    assert context_dim == hidden_size, (
        "PyTorch forward only type-checks when context_dim == hidden_size")
    ks = jax.random.split(key, 6)

    def linear(kw, kb, out_f, in_f):
        bound = 1.0 / jnp.sqrt(jnp.float32(in_f))
        w = jax.random.uniform(kw, (out_f, in_f), jnp.float32, -bound, bound)
        b = jax.random.uniform(kb, (out_f,), jnp.float32, -bound, bound)
        return w, b

    w_hid, b_hid = linear(ks[0], ks[1], hidden_size, hidden_size * 2)
    w_ctx, b_ctx = linear(ks[2], ks[3], 100, context_dim)
    w_emb, b_emb = linear(ks[4], ks[5], output_size, 100 + hidden_size)

    Hp = _round_up(hidden_size, lane)      # padded hidden width
    Mp = _round_up(100, lane)              # padded "100" width
    Op = _round_up(output_size, lane)      # padded output width

    # Zero padding keeps the math exact: padded weight rows/cols and padded
    # bias entries are 0, so padded activation lanes are tanh(0) = 0 and never
    # contribute to downstream dots.
    w1 = jnp.pad(w_hid.T, ((0, 0), (0, Hp - hidden_size)))               # (2H, Hp)
    b1 = jnp.pad(b_hid, (0, Hp - hidden_size))[None, :]                  # (1, Hp)
    w2 = jnp.pad(w_ctx.T, ((0, Hp - context_dim), (0, Mp - 100)))        # (Hp, Mp)
    b2 = jnp.pad(b_ctx, (0, Mp - 100))[None, :]                          # (1, Mp)
    # only the first 100 input columns of embedding_layer can ever be used
    w3 = jnp.pad(w_emb[:, :100].T, ((0, Mp - 100), (0, Op - output_size)))  # (Mp, Op)
    b3 = jnp.pad(b_emb, (0, Op - output_size))[None, :]                  # (1, Op)

    return {"w1": w1, "b1": b1, "w2": w2, "b2": b2, "w3": w3, "b3": b3}


def reference(x, p, out_dim, mm_dtype=jnp.float32):
    f32 = jnp.float32
    xc = x.astype(mm_dtype)
    w1, w2, w3 = (p["w1"].astype(mm_dtype), p["w2"].astype(mm_dtype),
                  p["w3"].astype(mm_dtype))
    h1 = jnp.tanh(jnp.dot(xc, w1, preferred_element_type=f32) + p["b1"])
    h2 = jnp.tanh(jnp.dot(h1.astype(mm_dtype), w2,
                          preferred_element_type=f32) + p["b2"])
    h3 = jnp.tanh(jnp.dot(h2.astype(mm_dtype), w3,
                          preferred_element_type=f32) + p["b3"])
    return h3[:, :out_dim]


if __name__ == "__main__":
    hidden_size = 32
    output_size = 16
    context_dim = hidden_size   # required for the PyTorch forward to type-check
    batch = 16

    key = jax.random.PRNGKey(0)
    k_x, k_ctx, k_p = jax.random.split(key, 3)

    x = jax.random.normal(k_x, (batch, hidden_size * 2), jnp.float32)
    # `context` is an unused forward argument in the PyTorch module.
    context = jax.random.normal(k_ctx, (batch, context_dim), jnp.float32)

    params = init_params(k_p, hidden_size, output_size, context_dim)

    # f32 path: exact parity with the (repaired) module semantics.
    out = wde_rnn_decoder(x, params, out_dim=output_size)
    out = jax.block_until_ready(out)
    ref = reference(x, params, output_size)
    assert out.shape == (batch, output_size)
    assert jnp.allclose(out, ref, atol=1e-5, rtol=1e-5)

    # bf16 MXU-operand path (f32 accumulate + f32 tanh), checked against a
    # bf16-cast reference with a loose tolerance.
    out_bf16 = jax.block_until_ready(
        wde_rnn_decoder(x, params, out_dim=output_size,
                        mm_dtype=jnp.bfloat16))
    ref_bf16 = reference(x, params, output_size, mm_dtype=jnp.bfloat16)
    assert out_bf16.shape == (batch, output_size)
    assert jnp.allclose(out_bf16, ref_bf16, atol=1e-2, rtol=1e-2)

    print("KERNEL_OK")
</pallas_src>

<mosaic_0001>
module attributes {stable_mosaic.version = 11 : i64} {
  func.func @wde_rnn_decoder_kernel(%arg0: i32, %arg1: memref<16x64xf32, #tpu.memory_space<vmem>>, %arg2: memref<64x128xf32, #tpu.memory_space<vmem>>, %arg3: memref<1x128xf32, #tpu.memory_space<vmem>>, %arg4: memref<128x128xf32, #tpu.memory_space<vmem>>, %arg5: memref<1x128xf32, #tpu.memory_space<vmem>>, %arg6: memref<128x128xf32, #tpu.memory_space<vmem>>, %arg7: memref<1x128xf32, #tpu.memory_space<vmem>>, %arg8: memref<16x128xf32, #tpu.memory_space<vmem>>) attributes {dimension_semantics = [#tpu.dimension_semantics<parallel>], iteration_bounds = array<i64: 1>, scalar_prefetch = 0 : i64, scratch_operands = 0 : i64, tpu.core_type = #tpu.core_type<tc>, window_params = [{transform_indices = @transform_0, window_bounds = array<i64: 16, 64>}, {pipeline_mode = #tpu.pipeline_mode<synchronous>, transform_indices = @transform_1, window_bounds = array<i64: 64, 128>}, {pipeline_mode = #tpu.pipeline_mode<synchronous>, transform_indices = @transform_2, window_bounds = array<i64: 1, 128>}, {pipeline_mode = #tpu.pipeline_mode<synchronous>, transform_indices = @transform_3, window_bounds = array<i64: 128, 128>}, {pipeline_mode = #tpu.pipeline_mode<synchronous>, transform_indices = @transform_4, window_bounds = array<i64: 1, 128>}, {pipeline_mode = #tpu.pipeline_mode<synchronous>, transform_indices = @transform_5, window_bounds = array<i64: 128, 128>}, {pipeline_mode = #tpu.pipeline_mode<synchronous>, transform_indices = @transform_6, window_bounds = array<i64: 1, 128>}, {transform_indices = @transform_7, window_bounds = array<i64: 16, 128>}]} {
    %c0 = arith.constant 0 : index
    %c0_0 = arith.constant 0 : index
    %0 = vector.load %arg1[%c0, %c0_0] : memref<16x64xf32, #tpu.memory_space<vmem>>, vector<16x64xf32>
    %c0_1 = arith.constant 0 : index
    %c0_2 = arith.constant 0 : index
    %1 = vector.load %arg2[%c0_1, %c0_2] : memref<64x128xf32, #tpu.memory_space<vmem>>, vector<64x128xf32>
    %cst = arith.constant dense<0.000000e+00> : vector<16x128xf32>
    %2 = tpu.matmul %0, %1, %cst {dimension_numbers = #tpu.dot_dimension_numbers<[1], [0], [0], [1], [0, 0, 1, 1], [], []>} : vector<16x64xf32>, vector<64x128xf32>, vector<16x128xf32> -> vector<16x128xf32>
    %c0_3 = arith.constant 0 : index
    %c0_4 = arith.constant 0 : index
    %3 = vector.load %arg3[%c0_3, %c0_4] : memref<1x128xf32, #tpu.memory_space<vmem>>, vector<1x128xf32>
    %4 = vector.broadcast %3 : vector<1x128xf32> to vector<16x128xf32>
    %5 = arith.addf %2, %4 : vector<16x128xf32>
    %6 = math.tanh %5 : vector<16x128xf32>
    %c0_5 = arith.constant 0 : index
    %c0_6 = arith.constant 0 : index
    %7 = vector.load %arg4[%c0_5, %c0_6] : memref<128x128xf32, #tpu.memory_space<vmem>>, vector<128x128xf32>
    %cst_7 = arith.constant dense<0.000000e+00> : vector<16x128xf32>
    %8 = tpu.matmul %6, %7, %cst_7 {dimension_numbers = #tpu.dot_dimension_numbers<[1], [0], [0], [1], [0, 0, 1, 1], [], []>} : vector<16x128xf32>, vector<128x128xf32>, vector<16x128xf32> -> vector<16x128xf32>
    %c0_8 = arith.constant 0 : index
    %c0_9 = arith.constant 0 : index
    %9 = vector.load %arg5[%c0_8, %c0_9] : memref<1x128xf32, #tpu.memory_space<vmem>>, vector<1x128xf32>
    %10 = vector.broadcast %9 : vector<1x128xf32> to vector<16x128xf32>
    %11 = arith.addf %8, %10 : vector<16x128xf32>
    %12 = math.tanh %11 : vector<16x128xf32>
    %c0_10 = arith.constant 0 : index
    %c0_11 = arith.constant 0 : index
    %13 = vector.load %arg6[%c0_10, %c0_11] : memref<128x128xf32, #tpu.memory_space<vmem>>, vector<128x128xf32>
    %cst_12 = arith.constant dense<0.000000e+00> : vector<16x128xf32>
    %14 = tpu.matmul %12, %13, %cst_12 {dimension_numbers = #tpu.dot_dimension_numbers<[1], [0], [0], [1], [0, 0, 1, 1], [], []>} : vector<16x128xf32>, vector<128x128xf32>, vector<16x128xf32> -> vector<16x128xf32>
    %c0_13 = arith.constant 0 : index
    %c0_14 = arith.constant 0 : index
    %15 = vector.load %arg7[%c0_13, %c0_14] : memref<1x128xf32, #tpu.memory_space<vmem>>, vector<1x128xf32>
    %16 = vector.broadcast %15 : vector<1x128xf32> to vector<16x128xf32>
    %17 = arith.addf %14, %16 : vector<16x128xf32>
    %18 = math.tanh %17 : vector<16x128xf32>
    %c0_15 = arith.constant 0 : index
    %c0_16 = arith.constant 0 : index
    %19 = vector.load %arg8[%c0_15, %c0_16] : memref<16x128xf32, #tpu.memory_space<vmem>>, vector<16x128xf32>
    tpu.vector_store %arg8[%c0_15, %c0_16], %18 {strides = array<i32>} : memref<16x128xf32, #tpu.memory_space<vmem>>, vector<16x128xf32>,
    return
  }
  func.func @transform_0(%arg0: i32) -> (i32, i32) {
    %c0_i32 = arith.constant 0 : i32
    %c0_i32_0 = arith.constant 0 : i32
    return %arg0, %c0_i32 : i32, i32
  }
  func.func @transform_1(%arg0: i32) -> (i32, i32) {
    %c0_i32 = arith.constant 0 : i32
    %c0_i32_0 = arith.constant 0 : i32
    %c0_i32_1 = arith.constant 0 : i32
    return %c0_i32, %c0_i32_0 : i32, i32
  }
  func.func @transform_2(%arg0: i32) -> (i32, i32) {
    %c0_i32 = arith.constant 0 : i32
    %c0_i32_0 = arith.constant 0 : i32
    %c0_i32_1 = arith.constant 0 : i32
    return %c0_i32, %c0_i32_0 : i32, i32
  }
  func.func @transform_3(%arg0: i32) -> (i32, i32) {
    %c0_i32 = arith.constant 0 : i32
    %c0_i32_0 = arith.constant 0 : i32
    %c0_i32_1 = arith.constant 0 : i32
    return %c0_i32, %c0_i32_0 : i32, i32
  }
  func.func @transform_4(%arg0: i32) -> (i32, i32) {
    %c0_i32 = arith.constant 0 : i32
    %c0_i32_0 = arith.constant 0 : i32
    %c0_i32_1 = arith.constant 0 : i32
    return %c0_i32, %c0_i32_0 : i32, i32
  }
  func.func @transform_5(%arg0: i32) -> (i32, i32) {
    %c0_i32 = arith.constant 0 : i32
    %c0_i32_0 = arith.constant 0 : i32
    %c0_i32_1 = arith.constant 0 : i32
    return %c0_i32, %c0_i32_0 : i32, i32
  }
  func.func @transform_6(%arg0: i32) -> (i32, i32) {
    %c0_i32 = arith.constant 0 : i32
    %c0_i32_0 = arith.constant 0 : i32
    %c0_i32_1 = arith.constant 0 : i32
    return %c0_i32, %c0_i32_0 : i32, i32
  }
  func.func @transform_7(%arg0: i32) -> (i32, i32) {
    %c0_i32 = arith.constant 0 : i32
    %c0_i32_0 = arith.constant 0 : i32
    return %arg0, %c0_i32 : i32, i32
  }
}

</mosaic_0001>

<llo_original>
// kernel: tpu_custom_call.1
$region0: #{tpu_custom_call.1}
  #allocation0 [shape = 'u32[]', space=smem, size = 0x4, offset = 0x4, fixed_abs, tag = 'smem constant byte address 0x4 - core index']
  #allocation1 [shape = 'u32[144,128]{1,0:T(1,128)}', space=vmem, size = 0x12000, scoped, tag = 'internal scratch']
  %s0 = inlined_call_operand.hbm [shape: f32[16,64], index: 0, kind: input, shape index: {}]
  %s1 = inlined_call_operand.hbm [shape: f32[64,128], index: 1, kind: input, shape index: {}]
  %s2 = inlined_call_operand.vmem [shape: f32[1,128], index: 2, kind: input, shape index: {}]
  %s3 = inlined_call_operand.hbm [shape: f32[128,128], index: 3, kind: input, shape index: {}]
  %s4 = inlined_call_operand.vmem [shape: f32[1,128], index: 4, kind: input, shape index: {}]
  %s5 = inlined_call_operand.hbm [shape: f32[128,128], index: 5, kind: input, shape index: {}]
  %s6 = inlined_call_operand.vmem [shape: f32[1,128], index: 6, kind: input, shape index: {}]
  %s7 = inlined_call_operand.hbm [shape: f32[16,128], index: 7, kind: output, shape index: {}]
  %s8 = sld [smem:[#allocation0]]
  $region54: #{tpu_custom_call.1} parent=0
    _
  %s10 = ssub.s32 1, %s8
  %s11 = scalar_select 0, %s10, %s8
  $region1: #{tpu_custom_call.1} parent=0
    #allocation2 [shape = 'u8[8192]{0}', space=vmem, size = 0x2000, scoped, tag = 'input window, operand 0, single buffered']
    #allocation3 [shape = 's32[1]{0}', space=sflag, size = 0x4, scoped, tag = 'scoped memory for tpu_custom_call.1']
    #allocation4 [shape = 's32[1]{0}', space=sflag, size = 0x4, scoped, tag = 'scoped memory for tpu_custom_call.1']
    #allocation5 [shape = 'u8[32768]{0}', space=vmem, size = 0x8000, scoped, tag = 'input window, operand 1, single buffered']
    #allocation6 [shape = 's32[1]{0}', space=sflag, size = 0x4, scoped, tag = 'scoped memory for tpu_custom_call.1']
    #allocation7 [shape = 'u8[65536]{0}', space=vmem, size = 0x10000, scoped, tag = 'input window, operand 3, single buffered']
    #allocation8 [shape = 'u8[65536]{0}', space=vmem, size = 0x10000, scoped, tag = 'input window, operand 5, single buffered']
    #allocation9 [shape = 's32[1]{0}', space=sflag, size = 0x4, scoped, tag = 'scoped memory for tpu_custom_call.1']
    #allocation10 [shape = 'u8[8192]{0}', space=vmem, size = 0x2000, scoped, tag = 'output window, operand 0, single buffered']
    %12 = vsyncpa [#allocation3], 0
    %13 = vsyncpa [#allocation6], 0
    %14 = vsyncpa [#allocation9], 0
    %15 = vsyncpa [#allocation4], 0
    // Predicated region
    $region2: #{tpu_custom_call.1} parent=1 // pred_check
      _
    $region3: #{tpu_custom_call.1} parent=1 // pred_check_branch
      %17 = sbr.rel (0) target = $region5
    $region4: #{tpu_custom_call.1} parent=1 // pred_region
      %s19 = ssub.s32 256, 256
      %20 = vsyncadd [#allocation3], %s19
      %s21 = sshll.u32 [#allocation2], 4
      %s22 = int_to_ptr.vmem [resolvable:$true] %s21
      %27 = dma.hbm_to_vmem [thread:$0]  %s0, 256, %s22, [#allocation3], 128, 128, 8
    $region5: #{tpu_custom_call.1} parent=1 // pred_fallthru
      _
    // Predicated region
    $region6: #{tpu_custom_call.1} parent=1 // pred_check
      _
    $region7: #{tpu_custom_call.1} parent=1 // pred_check_branch
      %29 = sbr.rel (0) target = $region9
    $region8: #{tpu_custom_call.1} parent=1 // pred_region
      %s31 = ssub.s32 1024, 1024
      %32 = vsyncadd [#allocation6], %s31
      %s33 = sshll.u32 [#allocation5], 4
      %s34 = int_to_ptr.vmem [resolvable:$true] %s33
      %39 = dma.hbm_to_vmem [thread:$0]  %s1, 1024, %s34, [#allocation6], 128, 128, 8
    $region9: #{tpu_custom_call.1} parent=1 // pred_fallthru
      _
    // Predicated region
    $region10: #{tpu_custom_call.1} parent=1 // pred_check
      _
    $region11: #{tpu_custom_call.1} parent=1 // pred_check_branch
      %41 = sbr.rel (0) target = $region13
    $region12: #{tpu_custom_call.1} parent=1 // pred_region
      _
    $region13: #{tpu_custom_call.1} parent=1 // pred_fallthru
      _
    // Predicated region
    $region14: #{tpu_custom_call.1} parent=1 // pred_check
      _
    $region15: #{tpu_custom_call.1} parent=1 // pred_check_branch
      %43 = sbr.rel (0) target = $region17
    $region16: #{tpu_custom_call.1} parent=1 // pred_region
      %s45 = ssub.s32 2048, 2048
      %46 = vsyncadd [#allocation6], %s45
      %s47 = sshll.u32 [#allocation7], 4
      %s48 = int_to_ptr.vmem [resolvable:$true] %s47
      %53 = dma.hbm_to_vmem [thread:$0]  %s3, 2048, %s48, [#allocation6], 128, 128, 8
    $region17: #{tpu_custom_call.1} parent=1 // pred_fallthru
      _
    // Predicated region
    $region18: #{tpu_custom_call.1} parent=1 // pred_check
      _
    $region19: #{tpu_custom_call.1} parent=1 // pred_check_branch
      %55 = sbr.rel (0) target = $region21
    $region20: #{tpu_custom_call.1} parent=1 // pred_region
      _
    $region21: #{tpu_custom_call.1} parent=1 // pred_fallthru
      _
    // Predicated region
    $region22: #{tpu_custom_call.1} parent=1 // pred_check
      _
    $region23: #{tpu_custom_call.1} parent=1 // pred_check_branch
      %57 = sbr.rel (0) target = $region25
    $region24: #{tpu_custom_call.1} parent=1 // pred_region
      %s59 = ssub.s32 2048, 2048
      %60 = vsyncadd [#allocation9], %s59
      %s61 = sshll.u32 [#allocation8], 4
      %s62 = int_to_ptr.vmem [resolvable:$true] %s61
      %67 = dma.hbm_to_vmem [thread:$0]  %s5, 2048, %s62, [#allocation9], 128, 128, 8
    $region25: #{tpu_custom_call.1} parent=1 // pred_fallthru
      _
    // Predicated region
    $region26: #{tpu_custom_call.1} parent=1 // pred_check
      _
    $region27: #{tpu_custom_call.1} parent=1 // pred_check_branch
      %69 = sbr.rel (0) target = $region29
    $region28: #{tpu_custom_call.1} parent=1 // pred_region
      _
    $region29: #{tpu_custom_call.1} parent=1 // pred_fallthru
      _
    // Predicated region
    $region30: #{tpu_custom_call.1} parent=1 // pred_check
      _
    $region31: #{tpu_custom_call.1} parent=1 // pred_check_branch
      %71 = sbr.rel (0) target = $region33
    $region32: #{tpu_custom_call.1} parent=1 // pred_region
      %72 = dma.done [#allocation3], 256
    $region33: #{tpu_custom_call.1} parent=1 // pred_fallthru
      _
    // Predicated region
    $region34: #{tpu_custom_call.1} parent=1 // pred_check
      _
    $region35: #{tpu_custom_call.1} parent=1 // pred_check_branch
      %74 = sbr.rel (0) target = $region37
    $region36: #{tpu_custom_call.1} parent=1 // pred_region
      %75 = dma.done [#allocation6], 1024
    $region37: #{tpu_custom_call.1} parent=1 // pred_fallthru
      _
    // Predicated region
    $region38: #{tpu_custom_call.1} parent=1 // pred_check
      _
    $region39: #{tpu_custom_call.1} parent=1 // pred_check_branch
      %77 = sbr.rel (0) target = $region41
    $region40: #{tpu_custom_call.1} parent=1 // pred_region
      %78 = dma.done [#allocation6], 2048
    $region41: #{tpu_custom_call.1} parent=1 // pred_fallthru
      _
    // Predicated region
    $region42: #{tpu_custom_call.1} parent=1 // pred_check
      _
    $region43: #{tpu_custom_call.1} parent=1 // pred_check_branch
      %80 = sbr.rel (0) target = $region45
    $region44: #{tpu_custom_call.1} parent=1 // pred_region
      %81 = dma.done [#allocation9], 2048
    $region45: #{tpu_custom_call.1} parent=1 // pred_fallthru
      _
    %v82 = vld [vmem:[#allocation2] sm:$0xff]
    %v83 = vld [vmem:[#allocation2 + $0x8] sm:$0xff]
    %v84 = vld [vmem:[#allocation5] sm:$0xff]
    %v85 = vld [vmem:[#allocation5 + $0x8] sm:$0xff]
    %v86 = vld [vmem:[#allocation5 + $0x10] sm:$0xff]
    %v87 = vld [vmem:[#allocation5 + $0x18] sm:$0xff]
    %v88 = vld [vmem:[#allocation5 + $0x20] sm:$0xff]
    %v89 = vld [vmem:[#allocation5 + $0x28] sm:$0xff]
    %v90 = vld [vmem:[#allocation5 + $0x30] sm:$0xff]
    %v91 = vld [vmem:[#allocation5 + $0x38] sm:$0xff]
    %v92 = vld [vmem:[%s2] sm:$0x1]
    %v94 = vlaneseq
    %v95 = vshrl.u32 %v94, 7
    %v96 = vsub.s32 0, %v95
    %v97 = vrot.slane %v92, %v96
    %vm99 = vcmask 523264
    %v101 = vsel %vm99, %v82, 0
    %v104 = vsel %vm99, %v83, 0
    %106 = vmatprep.subr.mxu0 0.0
    %107 = vmatpush1.msra.mxu0 0.0
    %108 = vmatprep.subr.mxu0 0.0
    %109 = vmatpush1.msra.mxu0 0.0
    %110 = vmatprep.subr.mxu0 0.0
    %111 = vmatpush1.msra.mxu0 0.0
    %112 = vmatprep.subr.mxu0 0.0
    %113 = vmatpush1.msra.mxu0 0.0
    %114 = vmatprep.subr.mxu0 0.0
    %115 = vmatpush1.msra.mxu0 0.0
    %116 = vmatprep.subr.mxu0 0.0
    %117 = vmatpush1.msra.mxu0 0.0
    %118 = vmatprep.subr.mxu0 0.0
    %119 = vmatpush1.msra.mxu0 0.0
    %120 = vmatprep.subr.mxu0 0.0
    %121 = vmatpush1.msra.mxu0 0.0
    %122 = vmatprep.subr.mxu0 0.0
    %123 = vmatpush1.msra.mxu0 %v91
    %124 = vmatprep.subr.mxu0 0.0
    %125 = vmatpush1.msra.mxu0 %v90
    %126 = vmatprep.subr.mxu0 0.0
    %127 = vmatpush1.msra.mxu0 %v89
    %128 = vmatprep.subr.mxu0 0.0
    %129 = vmatpush1.msra.mxu0 %v88
    %130 = vmatprep.subr.mxu0 0.0
    %131 = vmatpush1.msra.mxu0 %v87
    %132 = vmatprep.subr.mxu0 0.0
    %133 = vmatpush1.msra.mxu0 %v86
    %134 = vmatprep.subr.mxu0 0.0
    %135 = vmatpush1.msra.mxu0 %v85
    %136 = vmatprep.subr.mxu0 0.0
    %137 = vmatpush1.msra.mxu0 %v84
    %138 = vmatprep.subr.mxu0 0.0
    %139 = vmatpush2.msra.mxu0 0.0
    %140 = vmatprep.subr.mxu0 0.0
    %141 = vmatpush2.msra.mxu0 0.0
    %142 = vmatprep.subr.mxu0 0.0
    %143 = vmatpush2.msra.mxu0 0.0
    %144 = vmatprep.subr.mxu0 0.0
    %145 = vmatpush2.msra.mxu0 0.0
    %146 = vmatprep.subr.mxu0 0.0
    %147 = vmatpush2.msra.mxu0 0.0
    %148 = vmatprep.subr.mxu0 0.0
    %149 = vmatpush2.msra.mxu0 0.0
    %150 = vmatprep.subr.mxu0 0.0
    %151 = vmatpush2.msra.mxu0 0.0
    %152 = vmatprep.subr.mxu0 0.0
    %153 = vmatpush2.msra.mxu0 0.0
    %154 = vmatprep.subr.mxu0 0.0
    %155 = vmatpush2.msra.mxu0 0.0
    %156 = vmatprep.subr.mxu0 0.0
    %157 = vmatpush2.msra.mxu0 0.0
    %158 = vmatprep.subr.mxu0 0.0
    %159 = vmatpush2.msra.mxu0 0.0
    %160 = vmatprep.subr.mxu0 0.0
    %161 = vmatpush2.msra.mxu0 0.0
    %162 = vmatprep.subr.mxu0 0.0
    %163 = vmatpush2.msra.mxu0 0.0
    %164 = vmatprep.subr.mxu0 0.0
    %165 = vmatpush2.msra.mxu0 0.0
    %166 = vmatprep.subr.mxu0 0.0
    %167 = vmatpush2.msra.mxu0 0.0
    %168 = vmatprep.subr.mxu0 0.0
    %169 = vmatpush2.msra.mxu0 0.0
    %170 = vmatprep.mubr.f32.mxu0 0.0
    %171 = vmatmul.mubr.f32.gmra.mxu0 %v101
    %v172 = vpop.f32.mrf.mxu0
    %v173 = vadd.f32 %v97, %v172
    %v174 = vpop.f32.mrf.mxu0
    %175 = vmatprep.mubr.f32.mxu0 0.0
    %176 = vmatmul.mubr.f32.gmra.mxu0 %v104
    %v177 = vpop.f32.mrf.mxu0
    %v178 = vadd.f32 %v97, %v177
    %v179 = vpop.f32.mrf.mxu0
    %180 = vdwg.mxu0
    %v181 = vtanh.pop %v173
    %v182 = vtanh.pop %v178
    %v183 = vld [vmem:[#allocation7] sm:$0xff]
    %v184 = vld [vmem:[#allocation7 + $0x8] sm:$0xff]
    %v185 = vld [vmem:[#allocation7 + $0x10] sm:$0xff]
    %v186 = vld [vmem:[#allocation7 + $0x18] sm:$0xff]
    %v187 = vld [vmem:[#allocation7 + $0x20] sm:$0xff]
    %v188 = vld [vmem:[#allocation7 + $0x28] sm:$0xff]
    %v189 = vld [vmem:[#allocation7 + $0x30] sm:$0xff]
    %v190 = vld [vmem:[#allocation7 + $0x38] sm:$0xff]
    %v191 = vld [vmem:[#allocation7 + $0x40] sm:$0xff]
    %v192 = vld [vmem:[#allocation7 + $0x48] sm:$0xff]
    %v193 = vld [vmem:[#allocation7 + $0x50] sm:$0xff]
    %v194 = vld [vmem:[#allocation7 + $0x58] sm:$0xff]
    %v195 = vld [vmem:[#allocation7 + $0x60] sm:$0xff]
    %v196 = vld [vmem:[#allocation7 + $0x68] sm:$0xff]
    %v197 = vld [vmem:[#allocation7 + $0x70] sm:$0xff]
    %v198 = vld [vmem:[#allocation7 + $0x78] sm:$0xff]
    %v199 = vld [vmem:[%s4] sm:$0x1]
    %v201 = vlaneseq
    %v202 = vshrl.u32 %v201, 7
    %v203 = vsub.s32 0, %v202
    %v204 = vrot.slane %v199, %v203
    %206 = vmatprep.subr.mxu0 0.0
    %207 = vmatpush1.msra.mxu0 %v198
    %208 = vmatprep.subr.mxu0 0.0
    %209 = vmatpush1.msra.mxu0 %v197
    %210 = vmatprep.subr.mxu0 0.0
    %211 = vmatpush1.msra.mxu0 %v196
    %212 = vmatprep.subr.mxu0 0.0
    %213 = vmatpush1.msra.mxu0 %v195
    %214 = vmatprep.subr.mxu0 0.0
    %215 = vmatpush1.msra.mxu0 %v194
    %216 = vmatprep.subr.mxu0 0.0
    %217 = vmatpush1.msra.mxu0 %v193
    %218 = vmatprep.subr.mxu0 0.0
    %219 = vmatpush1.msra.mxu0 %v192
    %220 = vmatprep.subr.mxu0 0.0
    %221 = vmatpush1.msra.mxu0 %v191
    %222 = vmatprep.subr.mxu0 0.0
    %223 = vmatpush1.msra.mxu0 %v190
    %224 = vmatprep.subr.mxu0 0.0
    %225 = vmatpush1.msra.mxu0 %v189
    %226 = vmatprep.subr.mxu0 0.0
    %227 = vmatpush1.msra.mxu0 %v188
    %228 = vmatprep.subr.mxu0 0.0
    %229 = vmatpush1.msra.mxu0 %v187
    %230 = vmatprep.subr.mxu0 0.0
    %231 = vmatpush1.msra.mxu0 %v186
    %232 = vmatprep.subr.mxu0 0.0
    %233 = vmatpush1.msra.mxu0 %v185
    %234 = vmatprep.subr.mxu0 0.0
    %235 = vmatpush1.msra.mxu0 %v184
    %236 = vmatprep.subr.mxu0 0.0
    %237 = vmatpush1.msra.mxu0 %v183
    %238 = vmatprep.subr.mxu0 0.0
    %239 = vmatpush2.msra.mxu0 0.0
    %240 = vmatprep.subr.mxu0 0.0
    %241 = vmatpush2.msra.mxu0 0.0
    %242 = vmatprep.subr.mxu0 0.0
    %243 = vmatpush2.msra.mxu0 0.0
    %244 = vmatprep.subr.mxu0 0.0
    %245 = vmatpush2.msra.mxu0 0.0
    %246 = vmatprep.subr.mxu0 0.0
    %247 = vmatpush2.msra.mxu0 0.0
    %248 = vmatprep.subr.mxu0 0.0
    %249 = vmatpush2.msra.mxu0 0.0
    %250 = vmatprep.subr.mxu0 0.0
    %251 = vmatpush2.msra.mxu0 0.0
    %252 = vmatprep.subr.mxu0 0.0
    %253 = vmatpush2.msra.mxu0 0.0
    %254 = vmatprep.subr.mxu0 0.0
    %255 = vmatpush2.msra.mxu0 0.0
    %256 = vmatprep.subr.mxu0 0.0
    %257 = vmatpush2.msra.mxu0 0.0
    %258 = vmatprep.subr.mxu0 0.0
    %259 = vmatpush2.msra.mxu0 0.0
    %260 = vmatprep.subr.mxu0 0.0
    %261 = vmatpush2.msra.mxu0 0.0
    %262 = vmatprep.subr.mxu0 0.0
    %263 = vmatpush2.msra.mxu0 0.0
    %264 = vmatprep.subr.mxu0 0.0
    %265 = vmatpush2.msra.mxu0 0.0
    %266 = vmatprep.subr.mxu0 0.0
    %267 = vmatpush2.msra.mxu0 0.0
    %268 = vmatprep.subr.mxu0 0.0
    %269 = vmatpush2.msra.mxu0 0.0
    %270 = vmatprep.mubr.f32.mxu0 0.0
    %271 = vmatmul.mubr.f32.gmra.mxu0 %v181
    %v272 = vpop.f32.mrf.mxu0
    %v273 = vadd.f32 %v204, %v272
    %v274 = vpop.f32.mrf.mxu0
    %275 = vmatprep.mubr.f32.mxu0 0.0
    %276 = vmatmul.mubr.f32.gmra.mxu0 %v182
    %v277 = vpop.f32.mrf.mxu0
    %v278 = vadd.f32 %v204, %v277
    %v279 = vpop.f32.mrf.mxu0
    %280 = vdwg.mxu0
    %v281 = vtanh.pop %v273
    %v282 = vtanh.pop %v278
    %v283 = vld [vmem:[#allocation8] sm:$0xff]
    %v284 = vld [vmem:[#allocation8 + $0x8] sm:$0xff]
    %v285 = vld [vmem:[#allocation8 + $0x10] sm:$0xff]
    %v286 = vld [vmem:[#allocation8 + $0x18] sm:$0xff]
    %v287 = vld [vmem:[#allocation8 + $0x20] sm:$0xff]
    %v288 = vld [vmem:[#allocation8 + $0x28] sm:$0xff]
    %v289 = vld [vmem:[#allocation8 + $0x30] sm:$0xff]
    %v290 = vld [vmem:[#allocation8 + $0x38] sm:$0xff]
    %v291 = vld [vmem:[#allocation8 + $0x40] sm:$0xff]
    %v292 = vld [vmem:[#allocation8 + $0x48] sm:$0xff]
    %v293 = vld [vmem:[#allocation8 + $0x50] sm:$0xff]
    %v294 = vld [vmem:[#allocation8 + $0x58] sm:$0xff]
    %v295 = vld [vmem:[#allocation8 + $0x60] sm:$0xff]
    %v296 = vld [vmem:[#allocation8 + $0x68] sm:$0xff]
    %v297 = vld [vmem:[#allocation8 + $0x70] sm:$0xff]
    %v298 = vld [vmem:[#allocation8 + $0x78] sm:$0xff]
    %v299 = vld [vmem:[%s6] sm:$0x1]
    %v301 = vlaneseq
    %v302 = vshrl.u32 %v301, 7
    %v303 = vsub.s32 0, %v302
    %v304 = vrot.slane %v299, %v303
    %306 = vmatprep.subr.mxu0 0.0
    %307 = vmatpush1.msra.mxu0 %v298
    %308 = vmatprep.subr.mxu0 0.0
    %309 = vmatpush1.msra.mxu0 %v297
    %310 = vmatprep.subr.mxu0 0.0
    %311 = vmatpush1.msra.mxu0 %v296
    %312 = vmatprep.subr.mxu0 0.0
    %313 = vmatpush1.msra.mxu0 %v295
    %314 = vmatprep.subr.mxu0 0.0
    %315 = vmatpush1.msra.mxu0 %v294
    %316 = vmatprep.subr.mxu0 0.0
    %317 = vmatpush1.msra.mxu0 %v293
    %318 = vmatprep.subr.mxu0 0.0
    %319 = vmatpush1.msra.mxu0 %v292
    %320 = vmatprep.subr.mxu0 0.0
    %321 = vmatpush1.msra.mxu0 %v291
    %322 = vmatprep.subr.mxu0 0.0
    %323 = vmatpush1.msra.mxu0 %v290
    %324 = vmatprep.subr.mxu0 0.0
    %325 = vmatpush1.msra.mxu0 %v289
    %326 = vmatprep.subr.mxu0 0.0
    %327 = vmatpush1.msra.mxu0 %v288
    %328 = vmatprep.subr.mxu0 0.0
    %329 = vmatpush1.msra.mxu0 %v287
    %330 = vmatprep.subr.mxu0 0.0
    %331 = vmatpush1.msra.mxu0 %v286
    %332 = vmatprep.subr.mxu0 0.0
    %333 = vmatpush1.msra.mxu0 %v285
    %334 = vmatprep.subr.mxu0 0.0
    %335 = vmatpush1.msra.mxu0 %v284
    %336 = vmatprep.subr.mxu0 0.0
    %337 = vmatpush1.msra.mxu0 %v283
    %338 = vmatprep.subr.mxu0 0.0
    %339 = vmatpush2.msra.mxu0 0.0
    %340 = vmatprep.subr.mxu0 0.0
    %341 = vmatpush2.msra.mxu0 0.0
    %342 = vmatprep.subr.mxu0 0.0
    %343 = vmatpush2.msra.mxu0 0.0
    %344 = vmatprep.subr.mxu0 0.0
    %345 = vmatpush2.msra.mxu0 0.0
    %346 = vmatprep.subr.mxu0 0.0
    %347 = vmatpush2.msra.mxu0 0.0
    %348 = vmatprep.subr.mxu0 0.0
    %349 = vmatpush2.msra.mxu0 0.0
    %350 = vmatprep.subr.mxu0 0.0
    %351 = vmatpush2.msra.mxu0 0.0
    %352 = vmatprep.subr.mxu0 0.0
    %353 = vmatpush2.msra.mxu0 0.0
    %354 = vmatprep.subr.mxu0 0.0
    %355 = vmatpush2.msra.mxu0 0.0
    %356 = vmatprep.subr.mxu0 0.0
    %357 = vmatpush2.msra.mxu0 0.0
    %358 = vmatprep.subr.mxu0 0.0
    %359 = vmatpush2.msra.mxu0 0.0
    %360 = vmatprep.subr.mxu0 0.0
    %361 = vmatpush2.msra.mxu0 0.0
    %362 = vmatprep.subr.mxu0 0.0
    %363 = vmatpush2.msra.mxu0 0.0
    %364 = vmatprep.subr.mxu0 0.0
    %365 = vmatpush2.msra.mxu0 0.0
    %366 = vmatprep.subr.mxu0 0.0
    %367 = vmatpush2.msra.mxu0 0.0
    %368 = vmatprep.subr.mxu0 0.0
    %369 = vmatpush2.msra.mxu0 0.0
    %370 = vmatprep.mubr.f32.mxu0 0.0
    %371 = vmatmul.mubr.f32.gmra.mxu0 %v281
    %v372 = vpop.f32.mrf.mxu0
    %v373 = vadd.f32 %v304, %v372
    %v374 = vpop.f32.mrf.mxu0
    %375 = vmatprep.mubr.f32.mxu0 0.0
    %376 = vmatmul.mubr.f32.gmra.mxu0 %v282
    %v377 = vpop.f32.mrf.mxu0
    %v378 = vadd.f32 %v304, %v377
    %v379 = vpop.f32.mrf.mxu0
    %380 = vdwg.mxu0
    %v381 = vtanh.pop %v373
    %v382 = vtanh.pop %v378
    %383 = vst [vmem:[#allocation10] sm:$0xff] %v381
    %384 = vst [vmem:[#allocation10 + $0x8] sm:$0xff] %v382
    // Predicated region
    $region46: #{tpu_custom_call.1} parent=1 // pred_check
      _
    $region47: #{tpu_custom_call.1} parent=1 // pred_check_branch
      %386 = sbr.rel (0) target = $region49
    $region48: #{tpu_custom_call.1} parent=1 // pred_region
      %s388 = ssub.s32 256, 256
      %389 = vsyncadd [#allocation4], %s388
      %s390 = sshll.u32 [#allocation10], 4
      %s391 = int_to_ptr.vmem [resolvable:$true] %s390
      %396 = dma.vmem_to_hbm [thread:$0]  %s391, 256, %s7, [#allocation4], 128, 128, 8
    $region49: #{tpu_custom_call.1} parent=1 // pred_fallthru
      _
    // Predicated region
    $region50: #{tpu_custom_call.1} parent=1 // pred_check
      _
    $region51: #{tpu_custom_call.1} parent=1 // pred_check_branch
      %398 = sbr.rel (0) target = $region53
    $region52: #{tpu_custom_call.1} parent=1 // pred_region
      %399 = dma.done [#allocation4], 256
    $region53: #{tpu_custom_call.1} parent=1 // pred_fallthru
      _
    %400 = vsyncpa [#allocation3], 1
    %401 = vsyncpa [#allocation6], 1
    %402 = vsyncpa [#allocation9], 1
    %403 = vsyncpa [#allocation4], 1

</llo_original>
